<compile_context>
chip_gen: v7x
topology: tpu7x:2x2x1
jax: 0.10.0
libtpu: 0.0.40
codegen_flags: <defaults>
</compile_context>

<pallas_src>
import functools

import jax
import jax.numpy as jnp
import numpy as np
from jax.experimental import pallas as pl
from jax.experimental.pallas import tpu as pltpu


def _leaky(x):
    return jnp.where(x > 0, x, 0.01 * x)


def resblock_kernel(x_ref, w1_ref, s1_ref, b1_ref, w2_ref, s2_ref, b2_ref,
                    out_ref):
    # x_ref   : (W, HC) f32 activation slab for one image, HC = H*C (lanes=(h,c))
    # wN_ref  : (3*HC, HC) banded conv weights in the MXU-operand dtype
    # sN, bN  : (1, HC)  f32 folded BatchNorm scale / bias (tiled over h)
    # out_ref : (W, HC)
    w_rows, hc = out_ref.shape
    cdt = w1_ref.dtype                       # MXU operand dtype (bf16 or f32)

    x = x_ref[...].astype(jnp.float32)

    # One-row masks for the W-boundary (zero-padding of the 3x3 conv along W).
    row = jax.lax.broadcasted_iota(jnp.int32, (w_rows, hc), 0)
    first_row = row == 0
    last_row = row == (w_rows - 1)

    def conv_bn(v, w_ref, s_ref, b_ref):
        # kw = -1 / 0 / +1 taps: exact one-row shifts on the XLU via
        # pltpu.roll + single-row zero mask (no MXU shift matmuls).
        v_m1 = jnp.where(first_row, 0.0, pltpu.roll(v, 1, 0))          # v[w-1]
        v_p1 = jnp.where(last_row, 0.0, pltpu.roll(v, w_rows - 1, 0))  # v[w+1]
        # Three accumulating K=HC matmuls against the three kw row-blocks of
        # the banded weight (kh taps, Cin contraction and H padding live in
        # the matrix).  Operands cast to the compute dtype right at the MXU;
        # accumulation, BN, residual and LeakyReLU stay f32.
        acc = jnp.dot(v_m1.astype(cdt), w_ref[0:hc, :],
                      preferred_element_type=jnp.float32)
        acc = acc + jnp.dot(v.astype(cdt), w_ref[hc:2 * hc, :],
                            preferred_element_type=jnp.float32)
        acc = acc + jnp.dot(v_p1.astype(cdt), w_ref[2 * hc:3 * hc, :],
                            preferred_element_type=jnp.float32)
        return acc * s_ref[...] + b_ref[...]           # folded inference BN

    y1 = _leaky(conv_bn(x, w1_ref, s1_ref, b1_ref))    # CBL1
    y2 = conv_bn(y1, w2_ref, s2_ref, b2_ref)           # CBL2 (no activation)
    out_ref[...] = _leaky(x + y2).astype(out_ref.dtype)


def _band_weights(w_hwio, height):
    """(3,3,Cin,Cout) conv kernel -> (3*H*Cin, H*Cout) banded matrix.

    Row block kw in {0,1,2} multiplies the slab shifted by dw = kw-1 along W.
    Within a block, rows are (hi, ci) and columns (ho, co); the entry is
    K[hi-ho+1, kw, ci, co] when |hi-ho| <= 1, else 0 -- i.e. the kh taps, the
    channel contraction and the H zero-padding all live in the matrix.
    Shared across the batch (no O(N^2) block-diagonal folding).
    """
    kh, kw, cin, cout = w_hwio.shape
    h = jnp.arange(height)
    dh = h[:, None] - h[None, :]                        # (Hi, Ho) = hi - ho
    valid = (jnp.abs(dh) <= 1).astype(w_hwio.dtype)
    sel = w_hwio[jnp.clip(dh + 1, 0, kh - 1)]           # (Hi, Ho, KW, Ci, Co)
    sel = sel * valid[:, :, None, None, None]
    sel = jnp.transpose(sel, (2, 0, 3, 1, 4))           # (KW, Hi, Ci, Ho, Co)
    return sel.reshape(kw * height * cin, height * cout)


def prepare_resblock_params(w1_hwio, s1, b1, w2_hwio, s2, b2, height,
                            compute_dtype=jnp.bfloat16):
    """One-time (model-load) parameter prep: banded weights, operand-dtype
    casts and BN scale/bias tiling are hoisted out of the per-call hot path."""
    c = w1_hwio.shape[2]
    hc = height * c
    return {
        "w1": _band_weights(w1_hwio, height).astype(compute_dtype),
        "s1": jnp.tile(s1.astype(jnp.float32), height).reshape(1, hc),
        "b1": jnp.tile(b1.astype(jnp.float32), height).reshape(1, hc),
        "w2": _band_weights(w2_hwio, height).astype(compute_dtype),
        "s2": jnp.tile(s2.astype(jnp.float32), height).reshape(1, hc),
        "b2": jnp.tile(b2.astype(jnp.float32), height).reshape(1, hc),
    }


def nhwc_to_slab(x_nhwc):
    """NHWC -> (N, W, H*C).  Pay once per chain of resblocks, not per block."""
    n, h, w, c = x_nhwc.shape
    return jnp.transpose(x_nhwc, (0, 2, 1, 3)).reshape(n, w, h * c)


def slab_to_nhwc(x_slab, height):
    n, w, hc = x_slab.shape
    return jnp.transpose(x_slab.reshape(n, w, height, hc // height),
                         (0, 2, 1, 3))


def resblock_slab(x_slab, params):
    """Apply one resblock on the (N, W, H*C) slab layout (chainable)."""
    n, w, hc = x_slab.shape
    return pl.pallas_call(
        resblock_kernel,
        out_shape=jax.ShapeDtypeStruct((n, w, hc), x_slab.dtype),
        grid_spec=pltpu.PrefetchScalarGridSpec(
            num_scalar_prefetch=0,
            grid=(n,),                          # batch: parallel grid axis
            in_specs=[
                pl.BlockSpec((None, w, hc), lambda i: (i, 0, 0)),
                # Shared weights / BN params: same block every step -> stay
                # VMEM-resident across the (parallel) batch axis.
                pl.BlockSpec((3 * hc, hc), lambda i: (0, 0)),
                pl.BlockSpec((1, hc), lambda i: (0, 0)),
                pl.BlockSpec((1, hc), lambda i: (0, 0)),
                pl.BlockSpec((3 * hc, hc), lambda i: (0, 0)),
                pl.BlockSpec((1, hc), lambda i: (0, 0)),
                pl.BlockSpec((1, hc), lambda i: (0, 0)),
            ],
            out_specs=pl.BlockSpec((None, w, hc), lambda i: (i, 0, 0)),
        ),
        # Batch axis is independent -> v7x's two TensorCores can split it.
        # For production HC, also tile K / output lanes over a reduction axis
        # and set vmem_limit_bytes here (weights are 2 * 3*HC^2 * sizeof(dtype)).
        compiler_params=pltpu.CompilerParams(
            dimension_semantics=("parallel",)),
    )(x_slab, params["w1"], params["s1"], params["b1"],
      params["w2"], params["s2"], params["b2"])


def resblock_nhwc(x_nhwc, params):
    """Convenience single-block entry point (layout conversion included)."""
    h = x_nhwc.shape[1]
    return slab_to_nhwc(resblock_slab(nhwc_to_slab(x_nhwc), params), h)


def resblock_ref(x_nhwc, w1_hwio, s1, b1, w2_hwio, s2, b2,
                 compute_dtype=jnp.float32):
    """Pure-JAX reference (XLA conv) with the same MXU-operand dtype."""
    def conv(v, w):
        return jax.lax.conv_general_dilated(
            v.astype(compute_dtype), w.astype(compute_dtype),
            window_strides=(1, 1), padding="SAME",
            dimension_numbers=("NHWC", "HWIO", "NHWC"),
            preferred_element_type=jnp.float32)
    y1 = _leaky(conv(x_nhwc, w1_hwio) * s1 + b1)
    y2 = conv(y1, w2_hwio) * s2 + b2
    return _leaky(x_nhwc + y2)


def fold_bn(gamma, beta, running_mean, running_var, eps=1e-5):
    scale = gamma / jnp.sqrt(running_var + eps)
    bias = beta - running_mean * scale
    return scale, bias


if __name__ == "__main__":
    # Shapes consistent with resblock(c=4) on a (2, 4, 16, 16) NCHW input.
    N, C, H, W = 2, 4, 16, 16
    key = jax.random.PRNGKey(0)
    k = jax.random.split(key, 11)

    # Input (PyTorch NCHW convention), transposed to NHWC for the wrapper.
    x_nchw = jax.random.normal(k[0], (N, C, H, W), jnp.float32)
    x_nhwc = jnp.transpose(x_nchw, (0, 2, 3, 1))

    # Conv weights (PyTorch stores (Cout, Cin, 3, 3); generated in HWIO).
    w1 = jax.random.normal(k[1], (3, 3, C, C), jnp.float32) * 0.2
    w2 = jax.random.normal(k[2], (3, 3, C, C), jnp.float32) * 0.2

    # BatchNorm params (inference / running-stats semantics), folded.
    g1 = 0.5 + jax.random.uniform(k[3], (C,), jnp.float32)
    be1 = 0.1 * jax.random.normal(k[4], (C,), jnp.float32)
    m1 = 0.1 * jax.random.normal(k[5], (C,), jnp.float32)
    v1 = 0.5 + jax.random.uniform(k[6], (C,), jnp.float32)
    g2 = 0.5 + jax.random.uniform(k[7], (C,), jnp.float32)
    be2 = 0.1 * jax.random.normal(k[8], (C,), jnp.float32)
    m2 = 0.1 * jax.random.normal(k[9], (C,), jnp.float32)
    v2 = 0.5 + jax.random.uniform(k[10], (C,), jnp.float32)
    s1, b1 = fold_bn(g1, be1, m1, v1)
    s2, b2 = fold_bn(g2, be2, m2, v2)

    # Layout conversion once (a DHNet chain of resblocks stays in slab layout).
    x_slab = nhwc_to_slab(x_nhwc)

    # --- bf16 MXU-operand path (standardized path on v5e/v6e/v7x) ---
    p_bf16 = prepare_resblock_params(w1, s1, b1, w2, s2, b2, H,
                                     compute_dtype=jnp.bfloat16)
    out_bf16 = slab_to_nhwc(resblock_slab(x_slab, p_bf16), H)
    out_bf16 = jax.block_until_ready(out_bf16)
    ref_bf16 = resblock_ref(x_nhwc, w1, s1, b1, w2, s2, b2,
                            compute_dtype=jnp.bfloat16)
    np.testing.assert_allclose(np.asarray(out_bf16), np.asarray(ref_bf16),
                               rtol=2e-2, atol=5e-2)

    # --- f32 MXU-operand path.  Both sides use default TPU matmul precision
    # (per review, strict f32 needs an explicit HIGHEST precision; tolerance
    # below covers a possible reduced-precision default pass on either side,
    # while still catching any structural/layout error). ---
    p_f32 = prepare_resblock_params(w1, s1, b1, w2, s2, b2, H,
                                    compute_dtype=jnp.float32)
    out_f32 = slab_to_nhwc(resblock_slab(x_slab, p_f32), H)
    out_f32 = jax.block_until_ready(out_f32)
    ref_f32 = resblock_ref(x_nhwc, w1, s1, b1, w2, s2, b2,
                           compute_dtype=jnp.float32)
    np.testing.assert_allclose(np.asarray(out_f32), np.asarray(ref_f32),
                               rtol=2e-2, atol=3e-2)

    # Back to PyTorch NCHW convention if a caller needs it.
    _ = jnp.transpose(out_bf16, (0, 3, 1, 2))

    print("KERNEL_OK")
</pallas_src>

<mosaic_0001>
module attributes {stable_mosaic.version = 11 : i64} {
  func.func @resblock_kernel(%arg0: i32, %arg1: memref<1x16x64xf32, #tpu.memory_space<vmem>>, %arg2: memref<192x64xbf16, #tpu.memory_space<vmem>>, %arg3: memref<1x64xf32, #tpu.memory_space<vmem>>, %arg4: memref<1x64xf32, #tpu.memory_space<vmem>>, %arg5: memref<192x64xbf16, #tpu.memory_space<vmem>>, %arg6: memref<1x64xf32, #tpu.memory_space<vmem>>, %arg7: memref<1x64xf32, #tpu.memory_space<vmem>>, %arg8: memref<1x16x64xf32, #tpu.memory_space<vmem>>) attributes {dimension_semantics = [#tpu.dimension_semantics<parallel>], iteration_bounds = array<i64: 2>, scalar_prefetch = 0 : i64, scratch_operands = 0 : i64, tpu.core_type = #tpu.core_type<tc>, window_params = [{transform_indices = @transform_0, window_bounds = array<i64: 1, 16, 64>}, {pipeline_mode = #tpu.pipeline_mode<synchronous>, transform_indices = @transform_1, window_bounds = array<i64: 192, 64>}, {pipeline_mode = #tpu.pipeline_mode<synchronous>, transform_indices = @transform_2, window_bounds = array<i64: 1, 64>}, {pipeline_mode = #tpu.pipeline_mode<synchronous>, transform_indices = @transform_3, window_bounds = array<i64: 1, 64>}, {pipeline_mode = #tpu.pipeline_mode<synchronous>, transform_indices = @transform_4, window_bounds = array<i64: 192, 64>}, {pipeline_mode = #tpu.pipeline_mode<synchronous>, transform_indices = @transform_5, window_bounds = array<i64: 1, 64>}, {pipeline_mode = #tpu.pipeline_mode<synchronous>, transform_indices = @transform_6, window_bounds = array<i64: 1, 64>}, {transform_indices = @transform_7, window_bounds = array<i64: 1, 16, 64>}]} {
    %c0 = arith.constant 0 : index
    %c0_0 = arith.constant 0 : index
    %c0_1 = arith.constant 0 : index
    %0 = vector.load %arg1[%c0, %c0_0, %c0_1] : memref<1x16x64xf32, #tpu.memory_space<vmem>>, vector<1x16x64xf32>
    %1 = vector.shape_cast %0 : vector<1x16x64xf32> to vector<16x64xf32>
    %2 = tpu.iota {dimensions = array<i32: 0>} : vector<16x64xi32>
    %c0_i32 = arith.constant 0 : i32
    %3 = vector.broadcast %c0_i32 : i32 to vector<16x64xi32>
    %4 = arith.cmpi eq, %2, %3 : vector<16x64xi32>
    %c15_i32 = arith.constant 15 : i32
    %5 = vector.broadcast %c15_i32 : i32 to vector<16x64xi32>
    %6 = arith.cmpi eq, %2, %5 : vector<16x64xi32>
    %c1_i32 = arith.constant 1 : i32
    %7 = tpu.dynamic_rotate %1 by %c1_i32 dim 0 : vector<16x64xf32>, i32 -> vector<16x64xf32>
    %cst = arith.constant 0.000000e+00 : f32
    %8 = vector.broadcast %cst : f32 to vector<16x64xf32>
    %9 = arith.select %4, %8, %7 : vector<16x64xi1>, vector<16x64xf32>
    %c15_i32_2 = arith.constant 15 : i32
    %10 = tpu.dynamic_rotate %1 by %c15_i32_2 dim 0 : vector<16x64xf32>, i32 -> vector<16x64xf32>
    %cst_3 = arith.constant 0.000000e+00 : f32
    %11 = vector.broadcast %cst_3 : f32 to vector<16x64xf32>
    %12 = arith.select %6, %11, %10 : vector<16x64xi1>, vector<16x64xf32>
    %13 = arith.truncf %9 : vector<16x64xf32> to vector<16x64xbf16>
    %c0_4 = arith.constant 0 : index
    %c0_5 = arith.constant 0 : index
    %14 = vector.load %arg2[%c0_4, %c0_5] : memref<192x64xbf16, #tpu.memory_space<vmem>>, vector<64x64xbf16>
    %cst_6 = arith.constant dense<0.000000e+00> : vector<16x64xf32>
    %15 = tpu.matmul %13, %14, %cst_6 {dimension_numbers = #tpu.dot_dimension_numbers<[1], [0], [0], [1], [0, 0, 1, 1], [], []>} : vector<16x64xbf16>, vector<64x64xbf16>, vector<16x64xf32> -> vector<16x64xf32>
    %16 = arith.truncf %1 : vector<16x64xf32> to vector<16x64xbf16>
    %c64 = arith.constant 64 : index
    %c0_7 = arith.constant 0 : index
    %17 = vector.load %arg2[%c64, %c0_7] : memref<192x64xbf16, #tpu.memory_space<vmem>>, vector<64x64xbf16>
    %cst_8 = arith.constant dense<0.000000e+00> : vector<16x64xf32>
    %18 = tpu.matmul %16, %17, %cst_8 {dimension_numbers = #tpu.dot_dimension_numbers<[1], [0], [0], [1], [0, 0, 1, 1], [], []>} : vector<16x64xbf16>, vector<64x64xbf16>, vector<16x64xf32> -> vector<16x64xf32>
    %19 = arith.addf %15, %18 : vector<16x64xf32>
    %20 = arith.truncf %12 : vector<16x64xf32> to vector<16x64xbf16>
    %c128 = arith.constant 128 : index
    %c0_9 = arith.constant 0 : index
    %21 = vector.load %arg2[%c128, %c0_9] : memref<192x64xbf16, #tpu.memory_space<vmem>>, vector<64x64xbf16>
    %cst_10 = arith.constant dense<0.000000e+00> : vector<16x64xf32>
    %22 = tpu.matmul %20, %21, %cst_10 {dimension_numbers = #tpu.dot_dimension_numbers<[1], [0], [0], [1], [0, 0, 1, 1], [], []>} : vector<16x64xbf16>, vector<64x64xbf16>, vector<16x64xf32> -> vector<16x64xf32>
    %23 = arith.addf %19, %22 : vector<16x64xf32>
    %c0_11 = arith.constant 0 : index
    %c0_12 = arith.constant 0 : index
    %24 = vector.load %arg3[%c0_11, %c0_12] : memref<1x64xf32, #tpu.memory_space<vmem>>, vector<1x64xf32>
    %25 = vector.broadcast %24 : vector<1x64xf32> to vector<16x64xf32>
    %26 = arith.mulf %23, %25 : vector<16x64xf32>
    %c0_13 = arith.constant 0 : index
    %c0_14 = arith.constant 0 : index
    %27 = vector.load %arg4[%c0_13, %c0_14] : memref<1x64xf32, #tpu.memory_space<vmem>>, vector<1x64xf32>
    %28 = vector.broadcast %27 : vector<1x64xf32> to vector<16x64xf32>
    %29 = arith.addf %26, %28 : vector<16x64xf32>
    %cst_15 = arith.constant 0.000000e+00 : f32
    %30 = vector.broadcast %cst_15 : f32 to vector<16x64xf32>
    %31 = arith.cmpf ogt, %29, %30 : vector<16x64xf32>
    %cst_16 = arith.constant 0.00999999977 : f32
    %32 = vector.broadcast %cst_16 : f32 to vector<16x64xf32>
    %33 = arith.mulf %32, %29 : vector<16x64xf32>
    %34 = arith.select %31, %29, %33 : vector<16x64xi1>, vector<16x64xf32>
    %c1_i32_17 = arith.constant 1 : i32
    %35 = tpu.dynamic_rotate %34 by %c1_i32_17 dim 0 : vector<16x64xf32>, i32 -> vector<16x64xf32>
    %cst_18 = arith.constant 0.000000e+00 : f32
    %36 = vector.broadcast %cst_18 : f32 to vector<16x64xf32>
    %37 = arith.select %4, %36, %35 : vector<16x64xi1>, vector<16x64xf32>
    %c15_i32_19 = arith.constant 15 : i32
    %38 = tpu.dynamic_rotate %34 by %c15_i32_19 dim 0 : vector<16x64xf32>, i32 -> vector<16x64xf32>
    %cst_20 = arith.constant 0.000000e+00 : f32
    %39 = vector.broadcast %cst_20 : f32 to vector<16x64xf32>
    %40 = arith.select %6, %39, %38 : vector<16x64xi1>, vector<16x64xf32>
    %41 = arith.truncf %37 : vector<16x64xf32> to vector<16x64xbf16>
    %c0_21 = arith.constant 0 : index
    %c0_22 = arith.constant 0 : index
    %42 = vector.load %arg5[%c0_21, %c0_22] : memref<192x64xbf16, #tpu.memory_space<vmem>>, vector<64x64xbf16>
    %cst_23 = arith.constant dense<0.000000e+00> : vector<16x64xf32>
    %43 = tpu.matmul %41, %42, %cst_23 {dimension_numbers = #tpu.dot_dimension_numbers<[1], [0], [0], [1], [0, 0, 1, 1], [], []>} : vector<16x64xbf16>, vector<64x64xbf16>, vector<16x64xf32> -> vector<16x64xf32>
    %44 = arith.truncf %34 : vector<16x64xf32> to vector<16x64xbf16>
    %c64_24 = arith.constant 64 : index
    %c0_25 = arith.constant 0 : index
    %45 = vector.load %arg5[%c64_24, %c0_25] : memref<192x64xbf16, #tpu.memory_space<vmem>>, vector<64x64xbf16>
    %cst_26 = arith.constant dense<0.000000e+00> : vector<16x64xf32>
    %46 = tpu.matmul %44, %45, %cst_26 {dimension_numbers = #tpu.dot_dimension_numbers<[1], [0], [0], [1], [0, 0, 1, 1], [], []>} : vector<16x64xbf16>, vector<64x64xbf16>, vector<16x64xf32> -> vector<16x64xf32>
    %47 = arith.addf %43, %46 : vector<16x64xf32>
    %48 = arith.truncf %40 : vector<16x64xf32> to vector<16x64xbf16>
    %c128_27 = arith.constant 128 : index
    %c0_28 = arith.constant 0 : index
    %49 = vector.load %arg5[%c128_27, %c0_28] : memref<192x64xbf16, #tpu.memory_space<vmem>>, vector<64x64xbf16>
    %cst_29 = arith.constant dense<0.000000e+00> : vector<16x64xf32>
    %50 = tpu.matmul %48, %49, %cst_29 {dimension_numbers = #tpu.dot_dimension_numbers<[1], [0], [0], [1], [0, 0, 1, 1], [], []>} : vector<16x64xbf16>, vector<64x64xbf16>, vector<16x64xf32> -> vector<16x64xf32>
    %51 = arith.addf %47, %50 : vector<16x64xf32>
    %c0_30 = arith.constant 0 : index
    %c0_31 = arith.constant 0 : index
    %52 = vector.load %arg6[%c0_30, %c0_31] : memref<1x64xf32, #tpu.memory_space<vmem>>, vector<1x64xf32>
    %53 = vector.broadcast %52 : vector<1x64xf32> to vector<16x64xf32>
    %54 = arith.mulf %51, %53 : vector<16x64xf32>
    %c0_32 = arith.constant 0 : index
    %c0_33 = arith.constant 0 : index
    %55 = vector.load %arg7[%c0_32, %c0_33] : memref<1x64xf32, #tpu.memory_space<vmem>>, vector<1x64xf32>
    %56 = vector.broadcast %55 : vector<1x64xf32> to vector<16x64xf32>
    %57 = arith.addf %54, %56 : vector<16x64xf32>
    %58 = arith.addf %1, %57 : vector<16x64xf32>
    %cst_34 = arith.constant 0.000000e+00 : f32
    %59 = vector.broadcast %cst_34 : f32 to vector<16x64xf32>
    %60 = arith.cmpf ogt, %58, %59 : vector<16x64xf32>
    %cst_35 = arith.constant 0.00999999977 : f32
    %61 = vector.broadcast %cst_35 : f32 to vector<16x64xf32>
    %62 = arith.mulf %61, %58 : vector<16x64xf32>
    %63 = arith.select %60, %58, %62 : vector<16x64xi1>, vector<16x64xf32>
    %c0_36 = arith.constant 0 : index
    %c0_37 = arith.constant 0 : index
    %c0_38 = arith.constant 0 : index
    %64 = vector.load %arg8[%c0_36, %c0_37, %c0_38] : memref<1x16x64xf32, #tpu.memory_space<vmem>>, vector<1x16x64xf32>
    %65 = vector.shape_cast %64 : vector<1x16x64xf32> to vector<16x64xf32>
    %66 = vector.shape_cast %63 : vector<16x64xf32> to vector<1x16x64xf32>
    tpu.vector_store %arg8[%c0_36, %c0_37, %c0_38], %66 {strides = array<i32>} : memref<1x16x64xf32, #tpu.memory_space<vmem>>, vector<1x16x64xf32>,
    return
  }
  func.func @transform_0(%arg0: i32) -> (i32, i32, i32) {
    %c0_i32 = arith.constant 0 : i32
    %c0_i32_0 = arith.constant 0 : i32
    %c0_i32_1 = arith.constant 0 : i32
    return %arg0, %c0_i32, %c0_i32_0 : i32, i32, i32
  }
  func.func @transform_1(%arg0: i32) -> (i32, i32) {
    %c0_i32 = arith.constant 0 : i32
    %c0_i32_0 = arith.constant 0 : i32
    %c0_i32_1 = arith.constant 0 : i32
    return %c0_i32, %c0_i32_0 : i32, i32
  }
  func.func @transform_2(%arg0: i32) -> (i32, i32) {
    %c0_i32 = arith.constant 0 : i32
    %c0_i32_0 = arith.constant 0 : i32
    %c0_i32_1 = arith.constant 0 : i32
    return %c0_i32, %c0_i32_0 : i32, i32
  }
  func.func @transform_3(%arg0: i32) -> (i32, i32) {
    %c0_i32 = arith.constant 0 : i32
    %c0_i32_0 = arith.constant 0 : i32
    %c0_i32_1 = arith.constant 0 : i32
    return %c0_i32, %c0_i32_0 : i32, i32
  }
  func.func @transform_4(%arg0: i32) -> (i32, i32) {
    %c0_i32 = arith.constant 0 : i32
    %c0_i32_0 = arith.constant 0 : i32
    %c0_i32_1 = arith.constant 0 : i32
    return %c0_i32, %c0_i32_0 : i32, i32
  }
  func.func @transform_5(%arg0: i32) -> (i32, i32) {
    %c0_i32 = arith.constant 0 : i32
    %c0_i32_0 = arith.constant 0 : i32
    %c0_i32_1 = arith.constant 0 : i32
    return %c0_i32, %c0_i32_0 : i32, i32
  }
  func.func @transform_6(%arg0: i32) -> (i32, i32) {
    %c0_i32 = arith.constant 0 : i32
    %c0_i32_0 = arith.constant 0 : i32
    %c0_i32_1 = arith.constant 0 : i32
    return %c0_i32, %c0_i32_0 : i32, i32
  }
  func.func @transform_7(%arg0: i32) -> (i32, i32, i32) {
    %c0_i32 = arith.constant 0 : i32
    %c0_i32_0 = arith.constant 0 : i32
    %c0_i32_1 = arith.constant 0 : i32
    return %arg0, %c0_i32, %c0_i32_0 : i32, i32, i32
  }
}

</mosaic_0001>

<llo_original>
// kernel: tpu_custom_call.1
$region0: #{tpu_custom_call.1}
  #allocation0 [shape = 'u32[]', space=smem, size = 0x4, offset = 0x4, fixed_abs, tag = 'smem constant byte address 0x4 - core index']
  #allocation1 [shape = 'u32[144,128]{1,0:T(1,128)}', space=vmem, size = 0x12000, scoped, tag = 'internal scratch']
  %s0 = inlined_call_operand.vmem [shape: f32[2,16,64], index: 0, kind: input, shape index: {}]
  %s1 = inlined_call_operand.vmem [shape: bf16[192,64], index: 1, kind: input, shape index: {}]
  %s2 = inlined_call_operand.vmem [shape: f32[1,64], index: 2, kind: input, shape index: {}]
  %s3 = inlined_call_operand.vmem [shape: f32[1,64], index: 3, kind: input, shape index: {}]
  %s4 = inlined_call_operand.vmem [shape: bf16[192,64], index: 4, kind: input, shape index: {}]
  %s5 = inlined_call_operand.vmem [shape: f32[1,64], index: 5, kind: input, shape index: {}]
  %s6 = inlined_call_operand.vmem [shape: f32[1,64], index: 6, kind: input, shape index: {}]
  %s7 = inlined_call_operand.hbm [shape: f32[2,16,64], index: 7, kind: output, shape index: {}]
  %s8 = sld [smem:[#allocation0]]
  $region61: #{tpu_custom_call.1} parent=0
    _
  %s10 = ssub.s32 1, %s8
  %s11 = scalar_select 0, %s10, %s8
  $region1: #{tpu_custom_call.1} parent=0
    #allocation2 [shape = 'u8[16384]{0}', space=vmem, size = 0x4000, scoped, tag = 'output window, operand 0']
    #allocation3 [shape = 's32[2]{0}', space=sflag, size = 0x8, scoped, tag = 'scoped memory for tpu_custom_call.1']
    %12 = vsyncpa [#allocation3], 0
    %s13 = scalar_lea.sflag [#allocation3], 1
    %14 = vsyncpa %s13, 0
    loop: start=0, step=1, limit=4
    $region2: #{tpu_custom_call.1} parent=1 // loop_pre_header
      _
    $region3: #{tpu_custom_call.1} parent=1 // loop_header
      %s16 = sphi 0, %s20
      %p17 = scmp.ge.s32.totalorder %s16, 4
      %s26 = sphi 0, %s28
      %s29 = sphi 0, %s26
      %s30 = sphi 0, %s29
      %s46 = sphi 0, %s30
      %s50 = sphi 0, %s50
      %s52 = sphi 0, %s50
      %s53 = sphi 0, %s52
      %s67 = sphi 0, %s53
      %s71 = sphi 0, %s71
      %s73 = sphi 0, %s71
      %s74 = sphi 0, %s73
      %s88 = sphi 0, %s74
      %s92 = sphi 0, %s92
      %s94 = sphi 0, %s92
      %s95 = sphi 0, %s94
      %s109 = sphi 0, %s95
      %s113 = sphi 0, %s113
      %s115 = sphi 0, %s113
      %s116 = sphi 0, %s115
      %s130 = sphi 0, %s116
      %s134 = sphi 0, %s134
      %s136 = sphi 0, %s134
      %s137 = sphi 0, %s136
      %s151 = sphi 0, %s137
      %s155 = sphi 0, %s155
      %s157 = sphi 0, %s155
      %s158 = sphi 0, %s157
      %s172 = sphi 0, %s158
      %s178 = sphi 0, %s180
      %s181 = sphi 0, %s178
      %s182 = sphi 0, %s181
      %s198 = sphi 0, %s182
    $region4: #{tpu_custom_call.1} parent=1 // loop_header_branch
      %19 = sbr.rel (%p17) target = $region8
    $region5: #{tpu_custom_call.1} parent=1 // loop_body
      %s21 = ssub.s32 %s16, 1
      %s22 = ssub.s32 %s16, 2
      %s23 = sadd.s32 %s16, 1
      %s24 = ssub.s32 %s16, %s23
      %p25 = scmp.eq.s32.totalorder %s24, 0
      %s27 = sadd.s32 %s26, 1
      %s28 = scalar_select %p25, %s26, %s27
      %p31 = pneg %p25
      %p32 = scmp.eq.s32.totalorder %s16, 1
      %p33 = por %p31, %p32
      %p34 = scmp.ne.s32.totalorder %s26, %s29
      %p35 = scmp.eq.s32.totalorder %s16, 0
      %p36 = por %p34, %p35
      %p37 = scmp.ne.s32.totalorder %s26, %s29
      %p38 = scmp.eq.s32.totalorder %s21, 1
      %p39 = por %p37, %p38
      %p40 = scmp.ne.s32.totalorder %s29, %s30
      %p41 = scmp.eq.s32.totalorder %s21, 0
      %p42 = por %p40, %p41
      %p43 = scmp.ne.s32.totalorder %s29, %s30
      %p44 = scmp.eq.s32.totalorder %s22, 1
      %p45 = por %p43, %p44
      %p47 = scmp.ne.s32.totalorder %s30, %s46
      %p48 = scmp.eq.s32.totalorder %s22, 0
      %p49 = por %p47, %p48
      %s51 = sadd.s32 %s50, 1
      %p54 = scmp.eq.s32.totalorder %s16, 1
      %p55 = scmp.ne.s32.totalorder %s50, %s52
      %p56 = scmp.eq.s32.totalorder %s16, 0
      %p57 = por %p55, %p56
      %p58 = scmp.ne.s32.totalorder %s50, %s52
      %p59 = scmp.eq.s32.totalorder %s21, 1
      %p60 = por %p58, %p59
      %p61 = scmp.ne.s32.totalorder %s52, %s53
      %p62 = scmp.eq.s32.totalorder %s21, 0
      %p63 = por %p61, %p62
      %p64 = scmp.ne.s32.totalorder %s52, %s53
      %p65 = scmp.eq.s32.totalorder %s22, 1
      %p66 = por %p64, %p65
      %p68 = scmp.ne.s32.totalorder %s53, %s67
      %p69 = scmp.eq.s32.totalorder %s22, 0
      %p70 = por %p68, %p69
      %s72 = sadd.s32 %s71, 1
      %p75 = scmp.eq.s32.totalorder %s16, 1
      %p76 = scmp.ne.s32.totalorder %s71, %s73
      %p77 = scmp.eq.s32.totalorder %s16, 0
      %p78 = por %p76, %p77
      %p79 = scmp.ne.s32.totalorder %s71, %s73
      %p80 = scmp.eq.s32.totalorder %s21, 1
      %p81 = por %p79, %p80
      %p82 = scmp.ne.s32.totalorder %s73, %s74
      %p83 = scmp.eq.s32.totalorder %s21, 0
      %p84 = por %p82, %p83
      %p85 = scmp.ne.s32.totalorder %s73, %s74
      %p86 = scmp.eq.s32.totalorder %s22, 1
      %p87 = por %p85, %p86
      %p89 = scmp.ne.s32.totalorder %s74, %s88
      %p90 = scmp.eq.s32.totalorder %s22, 0
      %p91 = por %p89, %p90
      %s93 = sadd.s32 %s92, 1
      %p96 = scmp.eq.s32.totalorder %s16, 1
      %p97 = scmp.ne.s32.totalorder %s92, %s94
      %p98 = scmp.eq.s32.totalorder %s16, 0
      %p99 = por %p97, %p98
      %p100 = scmp.ne.s32.totalorder %s92, %s94
      %p101 = scmp.eq.s32.totalorder %s21, 1
      %p102 = por %p100, %p101
      %p103 = scmp.ne.s32.totalorder %s94, %s95
      %p104 = scmp.eq.s32.totalorder %s21, 0
      %p105 = por %p103, %p104
      %p106 = scmp.ne.s32.totalorder %s94, %s95
      %p107 = scmp.eq.s32.totalorder %s22, 1
      %p108 = por %p106, %p107
      %p110 = scmp.ne.s32.totalorder %s95, %s109
      %p111 = scmp.eq.s32.totalorder %s22, 0
      %p112 = por %p110, %p111
      %s114 = sadd.s32 %s113, 1
      %p117 = scmp.eq.s32.totalorder %s16, 1
      %p118 = scmp.ne.s32.totalorder %s113, %s115
      %p119 = scmp.eq.s32.totalorder %s16, 0
      %p120 = por %p118, %p119
      %p121 = scmp.ne.s32.totalorder %s113, %s115
      %p122 = scmp.eq.s32.totalorder %s21, 1
      %p123 = por %p121, %p122
      %p124 = scmp.ne.s32.totalorder %s115, %s116
      %p125 = scmp.eq.s32.totalorder %s21, 0
      %p126 = por %p124, %p125
      %p127 = scmp.ne.s32.totalorder %s115, %s116
      %p128 = scmp.eq.s32.totalorder %s22, 1
      %p129 = por %p127, %p128
      %p131 = scmp.ne.s32.totalorder %s116, %s130
      %p132 = scmp.eq.s32.totalorder %s22, 0
      %p133 = por %p131, %p132
      %s135 = sadd.s32 %s134, 1
      %p138 = scmp.eq.s32.totalorder %s16, 1
      %p139 = scmp.ne.s32.totalorder %s134, %s136
      %p140 = scmp.eq.s32.totalorder %s16, 0
      %p141 = por %p139, %p140
      %p142 = scmp.ne.s32.totalorder %s134, %s136
      %p143 = scmp.eq.s32.totalorder %s21, 1
      %p144 = por %p142, %p143
      %p145 = scmp.ne.s32.totalorder %s136, %s137
      %p146 = scmp.eq.s32.totalorder %s21, 0
      %p147 = por %p145, %p146
      %p148 = scmp.ne.s32.totalorder %s136, %s137
      %p149 = scmp.eq.s32.totalorder %s22, 1
      %p150 = por %p148, %p149
      %p152 = scmp.ne.s32.totalorder %s137, %s151
      %p153 = scmp.eq.s32.totalorder %s22, 0
      %p154 = por %p152, %p153
      %s156 = sadd.s32 %s155, 1
      %p159 = scmp.eq.s32.totalorder %s16, 1
      %p160 = scmp.ne.s32.totalorder %s155, %s157
      %p161 = scmp.eq.s32.totalorder %s16, 0
      %p162 = por %p160, %p161
      %p163 = scmp.ne.s32.totalorder %s155, %s157
      %p164 = scmp.eq.s32.totalorder %s21, 1
      %p165 = por %p163, %p164
      %p166 = scmp.ne.s32.totalorder %s157, %s158
      %p167 = scmp.eq.s32.totalorder %s21, 0
      %p168 = por %p166, %p167
      %p169 = scmp.ne.s32.totalorder %s157, %s158
      %p170 = scmp.eq.s32.totalorder %s22, 1
      %p171 = por %p169, %p170
      %p173 = scmp.ne.s32.totalorder %s158, %s172
      %p174 = scmp.eq.s32.totalorder %s22, 0
      %p175 = por %p173, %p174
      %s176 = ssub.s32 %s16, %s23
      %p177 = scmp.eq.s32.totalorder %s176, 0
      %s179 = sadd.s32 %s178, 1
      %s180 = scalar_select %p177, %s178, %s179
      %p183 = pneg %p177
      %p184 = scmp.eq.s32.totalorder %s16, 1
      %p185 = por %p183, %p184
      %p186 = scmp.ne.s32.totalorder %s178, %s181
      %p187 = scmp.eq.s32.totalorder %s16, 0
      %p188 = por %p186, %p187
      %p189 = scmp.ne.s32.totalorder %s178, %s181
      %p190 = scmp.eq.s32.totalorder %s21, 1
      %p191 = por %p189, %p190
      %p192 = scmp.ne.s32.totalorder %s181, %s182
      %p193 = scmp.eq.s32.totalorder %s21, 0
      %p194 = por %p192, %p193
      %p195 = scmp.ne.s32.totalorder %s181, %s182
      %p196 = scmp.eq.s32.totalorder %s22, 1
      %p197 = por %p195, %p196
      %p199 = scmp.ne.s32.totalorder %s182, %s198
      %p200 = scmp.eq.s32.totalorder %s22, 0
      %p201 = por %p199, %p200
      %p202 = scmp.le.s32.totalorder 1, %s16
      %p203 = scmp.lt.s32.totalorder %s16, 3
      %p204 = pnand %p202, %p203
      %p205 = pneg %p204
      // Predicated region
      $region9: #{tpu_custom_call.1} parent=5 // pred_check
        _
      $region10: #{tpu_custom_call.1} parent=5 // pred_check_branch
        %207 = sbr.rel (%p204) target = $region12
      $region11: #{tpu_custom_call.1} parent=5 // pred_region
        %s208 = ssub.s32 %s16, 1
        // Predicated region
        $region13: #{tpu_custom_call.1} parent=11 // pred_check
          %p209 = pneg %p63
        $region14: #{tpu_custom_call.1} parent=11 // pred_check_branch
          %211 = sbr.rel (%p209) target = $region16
        $region15: #{tpu_custom_call.1} parent=11 // pred_region
          _
        $region16: #{tpu_custom_call.1} parent=11 // pred_fallthru
          _
        // Predicated region
        $region17: #{tpu_custom_call.1} parent=11 // pred_check
          %p212 = pneg %p84
        $region18: #{tpu_custom_call.1} parent=11 // pred_check_branch
          %214 = sbr.rel (%p212) target = $region20
        $region19: #{tpu_custom_call.1} parent=11 // pred_region
          _
        $region20: #{tpu_custom_call.1} parent=11 // pred_fallthru
          _
        // Predicated region
        $region21: #{tpu_custom_call.1} parent=11 // pred_check
          %p215 = pneg %p105
        $region22: #{tpu_custom_call.1} parent=11 // pred_check_branch
          %217 = sbr.rel (%p215) target = $region24
        $region23: #{tpu_custom_call.1} parent=11 // pred_region
          _
        $region24: #{tpu_custom_call.1} parent=11 // pred_fallthru
          _
        // Predicated region
        $region25: #{tpu_custom_call.1} parent=11 // pred_check
          %p218 = pneg %p126
        $region26: #{tpu_custom_call.1} parent=11 // pred_check_branch
          %220 = sbr.rel (%p218) target = $region28
        $region27: #{tpu_custom_call.1} parent=11 // pred_region
          _
        $region28: #{tpu_custom_call.1} parent=11 // pred_fallthru
          _
        // Predicated region
        $region29: #{tpu_custom_call.1} parent=11 // pred_check
          %p221 = pneg %p147
        $region30: #{tpu_custom_call.1} parent=11 // pred_check_branch
          %223 = sbr.rel (%p221) target = $region32
        $region31: #{tpu_custom_call.1} parent=11 // pred_region
          _
        $region32: #{tpu_custom_call.1} parent=11 // pred_fallthru
          _
        // Predicated region
        $region33: #{tpu_custom_call.1} parent=11 // pred_check
          %p224 = pneg %p168
        $region34: #{tpu_custom_call.1} parent=11 // pred_check_branch
          %226 = sbr.rel (%p224) target = $region36
        $region35: #{tpu_custom_call.1} parent=11 // pred_region
          _
        $region36: #{tpu_custom_call.1} parent=11 // pred_fallthru
          _
      $region12: #{tpu_custom_call.1} parent=5 // pred_fallthru
        _
      %p227 = scmp.lt.s32.totalorder %s16, 2
      // Predicated region
      $region37: #{tpu_custom_call.1} parent=5 // pred_check
        %p228 = pneg %p227
      $region38: #{tpu_custom_call.1} parent=5 // pred_check_branch
        %230 = sbr.rel (%p228) target = $region40
      $region39: #{tpu_custom_call.1} parent=5 // pred_region
        // Predicated region
        $region41: #{tpu_custom_call.1} parent=39 // pred_check
          %p231 = pneg %p36
        $region42: #{tpu_custom_call.1} parent=39 // pred_check_branch
          %233 = sbr.rel (%p231) target = $region44
        $region43: #{tpu_custom_call.1} parent=39 // pred_region
          %p234 = scmp.lt.s32.totalorder %s16, 1
          %s235 = scalar_select %p234, %s16, 1
          %s236 = smul.addr %s235, 2
          %s237 = smul.addr %s236, 8
          %s238 = scalar_lea.vmem %s0, %s237
        $region44: #{tpu_custom_call.1} parent=39 // pred_fallthru
          _
      $region40: #{tpu_custom_call.1} parent=5 // pred_fallthru
        _
      %p239 = scmp.le.s32.totalorder 1, %s16
      %p240 = scmp.lt.s32.totalorder %s16, 3
      %p241 = pnand %p239, %p240
      %p242 = pneg %p241
      // Predicated region
      $region45: #{tpu_custom_call.1} parent=5 // pred_check
        _
      $region46: #{tpu_custom_call.1} parent=5 // pred_check_branch
        %244 = sbr.rel (%p241) target = $region48
      $region47: #{tpu_custom_call.1} parent=5 // pred_region
        %s245 = ssub.s32 %s16, 1
        %p246 = scmp.lt.s32.totalorder %s21, 1
        %s247 = scalar_select %p246, %s21, 1
        %s248 = smul.addr %s247, 2
        %s249 = smul.addr %s248, 8
        %s250 = scalar_lea.vmem %s0, %s249
        %p251 = pneg %p42
        %p252 = pneg %p39
        %p253 = pneg %p63
        %p254 = pneg %p60
        %p255 = pneg %p84
        %p256 = pneg %p81
        %p257 = pneg %p105
        %p258 = pneg %p102
        %p259 = pneg %p126
        %p260 = pneg %p123
        %p261 = pneg %p147
        %p262 = pneg %p144
        %p263 = pneg %p168
        %p264 = pneg %p165
        %p265 = pneg %p194
        %p266 = pneg %p191
        %s267 = sand.u32 %s181, 1
        %s268 = scalar_lea.sflag [#allocation3], %s267
        %s269 = sand.u32 %s181, 1
        %s270 = smul.addr %s269, 16
        %s271 = scalar_lea.vmem [#allocation2], %s270
        %p272 = scmp.lt.s32.totalorder %s21, 1
        %s273 = scalar_select %p272, %s21, 1
        %s274 = smul.addr %s273, 2
        %s275 = smul.addr %s274, 8
        %s276 = scalar_lea.vmem %s0, %s275
        %v278 = vld [vmem:[%s276] sm:$0xff]
        %v279 = vld [vmem:[%s276 + $0x8] sm:$0xff]
        %v280 = vlaneseq
        %v281 = vshrl.u32 %v280, 7
        %v282 = vadd.s32 %v281, 8
        %vm283 = vcmp.eq.s32.totalorder %v281, 0
        %vm284 = vcmp.eq.s32.totalorder %v282, 0
        %vm285 = vcmp.eq.s32.totalorder %v281, 15
        %vm286 = vcmp.eq.s32.totalorder %v282, 15
        %v287 = vrot.slane %v278, 7
        %v288 = vrot.slane %v279, 7
        %vm289 = vcmp.lt.s32.totalorder %v281, 1
        %v290 = vsel %vm289, %v287, %v288
        %v291 = vsel %vm289, %v288, %v287
        %v292 = vsel %vm283, 0.0, %v291
        %v293 = vsel %vm284, 0.0, %v290
        %v294 = vrot.slane %v278, 1
        %v295 = vrot.slane %v279, 1
        %vm296 = vcmp.lt.s32.totalorder %v281, 7
        %v297 = vsel %vm296, %v294, %v295
        %v298 = vsel %vm296, %v295, %v294
        %v299 = vsel %vm285, 0.0, %v297
        %v300 = vsel %vm286, 0.0, %v298
        %v301 = vpack.c.bf16 %v293, %v292
        %v302 = vld [vmem:[%s1] sm:$0xf]
        %v303 = vld [vmem:[%s1 + $0x4] sm:$0xf]
        %v304 = vld [vmem:[%s1 + $0x8] sm:$0xf]
        %v305 = vld [vmem:[%s1 + $0xc] sm:$0xf]
        %v306 = vld [vmem:[%s1 + $0x10] sm:$0xf]
        %v307 = vld [vmem:[%s1 + $0x14] sm:$0xf]
        %v308 = vld [vmem:[%s1 + $0x18] sm:$0xf]
        %v309 = vld [vmem:[%s1 + $0x1c] sm:$0xf]
        %v310 = vpack.c.bf16 %v279, %v278
        %v311 = vld [vmem:[%s1 + $0x20] sm:$0xf]
        %v312 = vld [vmem:[%s1 + $0x24] sm:$0xf]
        %v313 = vld [vmem:[%s1 + $0x28] sm:$0xf]
        %v314 = vld [vmem:[%s1 + $0x2c] sm:$0xf]
        %v315 = vld [vmem:[%s1 + $0x30] sm:$0xf]
        %v316 = vld [vmem:[%s1 + $0x34] sm:$0xf]
        %v317 = vld [vmem:[%s1 + $0x38] sm:$0xf]
        %v318 = vld [vmem:[%s1 + $0x3c] sm:$0xf]
        %v327 = vunpack.c.l.b16 %v311
        %v328 = vunpack.c.l.b16 %v312
        %v329 = vunpack.c.l.b16 %v313
        %v330 = vunpack.c.l.b16 %v314
        %v331 = vunpack.c.l.b16 %v315
        %v332 = vunpack.c.l.b16 %v316
        %v333 = vunpack.c.l.b16 %v317
        %v334 = vunpack.c.l.b16 %v318
        %v335 = vpack.c.b16 %v328, %v327
        %v336 = vpack.c.b16 %v330, %v329
        %v337 = vpack.c.b16 %v332, %v331
        %v338 = vpack.c.b16 %v334, %v333
        %vm343 = vcmask 523264
        %v345 = vsel %vm343, %v310, 0
        %347 = vmatprep.subr.bf16.mxu0 0
        %348 = vmatpush1.bf16.msra.mxu0 %v335
        %349 = vmatprep.subr.bf16.mxu0 0
        %350 = vmatpush1.bf16.msra.mxu0 %v336
        %351 = vmatprep.subr.bf16.mxu0 0
        %352 = vmatpush1.bf16.msra.mxu0 %v337
        %353 = vmatprep.subr.bf16.mxu0 0
        %354 = vmatpush1.bf16.msra.mxu0 %v338
        %355 = vmatprep.subr.bf16.mxu0 0
        %356 = vmatpush1.bf16.msra.mxu0 0
        %357 = vmatprep.subr.bf16.mxu0 0
        %358 = vmatpush1.bf16.msra.mxu0 0
        %359 = vmatprep.subr.bf16.mxu0 0
        %360 = vmatpush1.bf16.msra.mxu0 0
        %361 = vmatprep.subr.bf16.mxu0 0
        %362 = vmatpush1.bf16.msra.mxu0 0
        %363 = vmatprep.subr.bf16.mxu0 0
        %364 = vmatpush1.bf16.msra.mxu0 0
        %365 = vmatprep.subr.bf16.mxu0 0
        %366 = vmatpush1.bf16.msra.mxu0 0
        %367 = vmatprep.subr.bf16.mxu0 0
        %368 = vmatpush1.bf16.msra.mxu0 0
        %369 = vmatprep.subr.bf16.mxu0 0
        %370 = vmatpush1.bf16.msra.mxu0 0
        %371 = vmatprep.subr.bf16.mxu0 0
        %372 = vmatpush1.bf16.msra.mxu0 0
        %373 = vmatprep.subr.bf16.mxu0 0
        %374 = vmatpush1.bf16.msra.mxu0 0
        %375 = vmatprep.subr.bf16.mxu0 0
        %376 = vmatpush1.bf16.msra.mxu0 0
        %377 = vmatprep.subr.bf16.mxu0 0
        %378 = vmatpush1.bf16.msra.mxu0 0
        %379 = vmatprep.mubr.bf16.mxu0 0
        %380 = vmatmul.mubr.bf16.gmra.mrb[0].mxu0 %v345
        %v381 = vpop.f32.mrb[0].mxu0
        %v382 = vadd.f32 0.0, %v381
        %v383 = vpop.f32.mrb[0].mxu0
        %v384 = vpop.f32.mrb[0].mxu0
        %v385 = vadd.f32 0.0, %v384
        %v386 = vpop.f32.mrb[0].mxu0
        %387 = vdwg.mxu0
        %v396 = vunpack.c.l.b16 %v302
        %v397 = vunpack.c.l.b16 %v303
        %v398 = vunpack.c.l.b16 %v304
        %v399 = vunpack.c.l.b16 %v305
        %v400 = vunpack.c.l.b16 %v306
        %v401 = vunpack.c.l.b16 %v307
        %v402 = vunpack.c.l.b16 %v308
        %v403 = vunpack.c.l.b16 %v309
        %v404 = vpack.c.b16 %v397, %v396
        %v405 = vpack.c.b16 %v399, %v398
        %v406 = vpack.c.b16 %v401, %v400
        %v407 = vpack.c.b16 %v403, %v402
        %v413 = vsel %vm343, %v301, 0
        %415 = vmatprep.subr.bf16.mxu0 0
        %416 = vmatpush1.bf16.msra.mxu0 %v404
        %417 = vmatprep.subr.bf16.mxu0 0
        %418 = vmatpush1.bf16.msra.mxu0 %v405
        %419 = vmatprep.subr.bf16.mxu0 0
        %420 = vmatpush1.bf16.msra.mxu0 %v406
        %421 = vmatprep.subr.bf16.mxu0 0
        %422 = vmatpush1.bf16.msra.mxu0 %v407
        %423 = vmatprep.subr.bf16.mxu0 0
        %424 = vmatpush1.bf16.msra.mxu0 0
        %425 = vmatprep.subr.bf16.mxu0 0
        %426 = vmatpush1.bf16.msra.mxu0 0
        %427 = vmatprep.subr.bf16.mxu0 0
        %428 = vmatpush1.bf16.msra.mxu0 0
        %429 = vmatprep.subr.bf16.mxu0 0
        %430 = vmatpush1.bf16.msra.mxu0 0
        %431 = vmatprep.subr.bf16.mxu0 0
        %432 = vmatpush1.bf16.msra.mxu0 0
        %433 = vmatprep.subr.bf16.mxu0 0
        %434 = vmatpush1.bf16.msra.mxu0 0
        %435 = vmatprep.subr.bf16.mxu0 0
        %436 = vmatpush1.bf16.msra.mxu0 0
        %437 = vmatprep.subr.bf16.mxu0 0
        %438 = vmatpush1.bf16.msra.mxu0 0
        %439 = vmatprep.subr.bf16.mxu0 0
        %440 = vmatpush1.bf16.msra.mxu0 0
        %441 = vmatprep.subr.bf16.mxu0 0
        %442 = vmatpush1.bf16.msra.mxu0 0
        %443 = vmatprep.subr.bf16.mxu0 0
        %444 = vmatpush1.bf16.msra.mxu0 0
        %445 = vmatprep.subr.bf16.mxu0 0
        %446 = vmatpush1.bf16.msra.mxu0 0
        %447 = vmatprep.mubr.bf16.mxu0 0
        %448 = vmatmul.mubr.bf16.gmra.mrb[0].mxu0 %v413
        %v449 = vpop.f32.mrb[0].mxu0
        %v450 = vadd.f32 %v382, %v449
        %v451 = vpop.f32.mrb[0].mxu0
        %v452 = vpop.f32.mrb[0].mxu0
        %v453 = vadd.f32 %v385, %v452
        %v454 = vpop.f32.mrb[0].mxu0
        %455 = vdwg.mxu0
        %v456 = vpack.c.bf16 %v300, %v299
        %v457 = vld [vmem:[%s1 + $0x40] sm:$0xf]
        %v458 = vld [vmem:[%s1 + $0x44] sm:$0xf]
        %v459 = vld [vmem:[%s1 + $0x48] sm:$0xf]
        %v460 = vld [vmem:[%s1 + $0x4c] sm:$0xf]
        %v461 = vld [vmem:[%s1 + $0x50] sm:$0xf]
        %v462 = vld [vmem:[%s1 + $0x54] sm:$0xf]
        %v463 = vld [vmem:[%s1 + $0x58] sm:$0xf]
        %v464 = vld [vmem:[%s1 + $0x5c] sm:$0xf]
        %v473 = vunpack.c.l.b16 %v457
        %v474 = vunpack.c.l.b16 %v458
        %v475 = vunpack.c.l.b16 %v459
        %v476 = vunpack.c.l.b16 %v460
        %v477 = vunpack.c.l.b16 %v461
        %v478 = vunpack.c.l.b16 %v462
        %v479 = vunpack.c.l.b16 %v463
        %v480 = vunpack.c.l.b16 %v464
        %v481 = vpack.c.b16 %v474, %v473
        %v482 = vpack.c.b16 %v476, %v475
        %v483 = vpack.c.b16 %v478, %v477
        %v484 = vpack.c.b16 %v480, %v479
        %v490 = vsel %vm343, %v456, 0
        %492 = vmatprep.subr.bf16.mxu0 0
        %493 = vmatpush1.bf16.msra.mxu0 %v481
        %494 = vmatprep.subr.bf16.mxu0 0
        %495 = vmatpush1.bf16.msra.mxu0 %v482
        %496 = vmatprep.subr.bf16.mxu0 0
        %497 = vmatpush1.bf16.msra.mxu0 %v483
        %498 = vmatprep.subr.bf16.mxu0 0
        %499 = vmatpush1.bf16.msra.mxu0 %v484
        %500 = vmatprep.subr.bf16.mxu0 0
        %501 = vmatpush1.bf16.msra.mxu0 0
        %502 = vmatprep.subr.bf16.mxu0 0
        %503 = vmatpush1.bf16.msra.mxu0 0
        %504 = vmatprep.subr.bf16.mxu0 0
        %505 = vmatpush1.bf16.msra.mxu0 0
        %506 = vmatprep.subr.bf16.mxu0 0
        %507 = vmatpush1.bf16.msra.mxu0 0
        %508 = vmatprep.subr.bf16.mxu0 0
        %509 = vmatpush1.bf16.msra.mxu0 0
        %510 = vmatprep.subr.bf16.mxu0 0
        %511 = vmatpush1.bf16.msra.mxu0 0
        %512 = vmatprep.subr.bf16.mxu0 0
        %513 = vmatpush1.bf16.msra.mxu0 0
        %514 = vmatprep.subr.bf16.mxu0 0
        %515 = vmatpush1.bf16.msra.mxu0 0
        %516 = vmatprep.subr.bf16.mxu0 0
        %517 = vmatpush1.bf16.msra.mxu0 0
        %518 = vmatprep.subr.bf16.mxu0 0
        %519 = vmatpush1.bf16.msra.mxu0 0
        %520 = vmatprep.subr.bf16.mxu0 0
        %521 = vmatpush1.bf16.msra.mxu0 0
        %522 = vmatprep.subr.bf16.mxu0 0
        %523 = vmatpush1.bf16.msra.mxu0 0
        %524 = vmatprep.mubr.bf16.mxu0 0
        %525 = vmatmul.mubr.bf16.gmra.mrb[0].mxu0 %v490
        %v526 = vpop.f32.mrb[0].mxu0
        %v527 = vadd.f32 0.0, %v526
        %v528 = vpop.f32.mrb[0].mxu0
        %v529 = vpop.f32.mrb[0].mxu0
        %v530 = vadd.f32 0.0, %v529
        %v531 = vpop.f32.mrb[0].mxu0
        %532 = vdwg.mxu0
        %v533 = vadd.f32 %v450, %v527
        %v534 = vadd.f32 %v453, %v530
        %v535 = vld [vmem:[%s2] sm:$0x1]
        %v537 = vlaneseq
        %v538 = vshrl.u32 %v537, 7
        %v539 = vsub.s32 0, %v538
        %v540 = vrot.slane %v535, %v539
        %v542 = vmul.f32 %v533, %v540
        %v543 = vmul.f32 %v534, %v540
        %v544 = vld [vmem:[%s3] sm:$0x1]
        %v546 = vlaneseq
        %v547 = vshrl.u32 %v546, 7
        %v548 = vsub.s32 0, %v547
        %v549 = vrot.slane %v544, %v548
        %v551 = vadd.f32 %v542, %v549
        %v552 = vadd.f32 %v543, %v549
        %vm553 = vcmp.gt.f32.partialorder %v551, 0.0
        %vm554 = vcmp.gt.f32.partialorder %v552, 0.0
        %v555 = vmul.f32 %v551, 0.01
        %v556 = vmul.f32 %v552, 0.01
        %v557 = vsel %vm553, %v551, %v555
        %v558 = vsel %vm554, %v552, %v556
        %v559 = vrot.slane %v557, 7
        %v560 = vrot.slane %v558, 7
        %v561 = vsel %vm289, %v559, %v560
        %v562 = vsel %vm289, %v560, %v559
        %v563 = vsel %vm283, 0.0, %v562
        %v564 = vsel %vm284, 0.0, %v561
        %v565 = vrot.slane %v557, 1
        %v566 = vrot.slane %v558, 1
        %v567 = vsel %vm296, %v565, %v566
        %v568 = vsel %vm296, %v566, %v565
        %v569 = vsel %vm285, 0.0, %v567
        %v570 = vsel %vm286, 0.0, %v568
        %v571 = vpack.c.bf16 %v564, %v563
        %v572 = vld [vmem:[%s4] sm:$0xf]
        %v573 = vld [vmem:[%s4 + $0x4] sm:$0xf]
        %v574 = vld [vmem:[%s4 + $0x8] sm:$0xf]
        %v575 = vld [vmem:[%s4 + $0xc] sm:$0xf]
        %v576 = vld [vmem:[%s4 + $0x10] sm:$0xf]
        %v577 = vld [vmem:[%s4 + $0x14] sm:$0xf]
        %v578 = vld [vmem:[%s4 + $0x18] sm:$0xf]
        %v579 = vld [vmem:[%s4 + $0x1c] sm:$0xf]
        %v580 = vpack.c.bf16 %v558, %v557
        %v581 = vld [vmem:[%s4 + $0x20] sm:$0xf]
        %v582 = vld [vmem:[%s4 + $0x24] sm:$0xf]
        %v583 = vld [vmem:[%s4 + $0x28] sm:$0xf]
        %v584 = vld [vmem:[%s4 + $0x2c] sm:$0xf]
        %v585 = vld [vmem:[%s4 + $0x30] sm:$0xf]
        %v586 = vld [vmem:[%s4 + $0x34] sm:$0xf]
        %v587 = vld [vmem:[%s4 + $0x38] sm:$0xf]
        %v588 = vld [vmem:[%s4 + $0x3c] sm:$0xf]
        %v597 = vunpack.c.l.b16 %v581
        %v598 = vunpack.c.l.b16 %v582
        %v599 = vunpack.c.l.b16 %v583
        %v600 = vunpack.c.l.b16 %v584
        %v601 = vunpack.c.l.b16 %v585
        %v602 = vunpack.c.l.b16 %v586
        %v603 = vunpack.c.l.b16 %v587
        %v604 = vunpack.c.l.b16 %v588
        %v605 = vpack.c.b16 %v598, %v597
        %v606 = vpack.c.b16 %v600, %v599
        %v607 = vpack.c.b16 %v602, %v601
        %v608 = vpack.c.b16 %v604, %v603
        %v614 = vsel %vm343, %v580, 0
        %616 = vmatprep.subr.bf16.mxu0 0
        %617 = vmatpush1.bf16.msra.mxu0 %v605
        %618 = vmatprep.subr.bf16.mxu0 0
        %619 = vmatpush1.bf16.msra.mxu0 %v606
        %620 = vmatprep.subr.bf16.mxu0 0
        %621 = vmatpush1.bf16.msra.mxu0 %v607
        %622 = vmatprep.subr.bf16.mxu0 0
        %623 = vmatpush1.bf16.msra.mxu0 %v608
        %624 = vmatprep.subr.bf16.mxu0 0
        %625 = vmatpush1.bf16.msra.mxu0 0
        %626 = vmatprep.subr.bf16.mxu0 0
        %627 = vmatpush1.bf16.msra.mxu0 0
        %628 = vmatprep.subr.bf16.mxu0 0
        %629 = vmatpush1.bf16.msra.mxu0 0
        %630 = vmatprep.subr.bf16.mxu0 0
        %631 = vmatpush1.bf16.msra.mxu0 0
        %632 = vmatprep.subr.bf16.mxu0 0
        %633 = vmatpush1.bf16.msra.mxu0 0
        %634 = vmatprep.subr.bf16.mxu0 0
        %635 = vmatpush1.bf16.msra.mxu0 0
        %636 = vmatprep.subr.bf16.mxu0 0
        %637 = vmatpush1.bf16.msra.mxu0 0
        %638 = vmatprep.subr.bf16.mxu0 0
        %639 = vmatpush1.bf16.msra.mxu0 0
        %640 = vmatprep.subr.bf16.mxu0 0
        %641 = vmatpush1.bf16.msra.mxu0 0
        %642 = vmatprep.subr.bf16.mxu0 0
        %643 = vmatpush1.bf16.msra.mxu0 0
        %644 = vmatprep.subr.bf16.mxu0 0
        %645 = vmatpush1.bf16.msra.mxu0 0
        %646 = vmatprep.subr.bf16.mxu0 0
        %647 = vmatpush1.bf16.msra.mxu0 0
        %648 = vmatprep.mubr.bf16.mxu0 0
        %649 = vmatmul.mubr.bf16.gmra.mrb[0].mxu0 %v614
        %v650 = vpop.f32.mrb[0].mxu0
        %v651 = vadd.f32 0.0, %v650
        %v652 = vpop.f32.mrb[0].mxu0
        %v653 = vpop.f32.mrb[0].mxu0
        %v654 = vadd.f32 0.0, %v653
        %v655 = vpop.f32.mrb[0].mxu0
        %656 = vdwg.mxu0
        %v665 = vunpack.c.l.b16 %v572
        %v666 = vunpack.c.l.b16 %v573
        %v667 = vunpack.c.l.b16 %v574
        %v668 = vunpack.c.l.b16 %v575
        %v669 = vunpack.c.l.b16 %v576
        %v670 = vunpack.c.l.b16 %v577
        %v671 = vunpack.c.l.b16 %v578
        %v672 = vunpack.c.l.b16 %v579
        %v673 = vpack.c.b16 %v666, %v665
        %v674 = vpack.c.b16 %v668, %v667
        %v675 = vpack.c.b16 %v670, %v669
        %v676 = vpack.c.b16 %v672, %v671
        %v682 = vsel %vm343, %v571, 0
        %684 = vmatprep.subr.bf16.mxu0 0
        %685 = vmatpush1.bf16.msra.mxu0 %v673
        %686 = vmatprep.subr.bf16.mxu0 0
        %687 = vmatpush1.bf16.msra.mxu0 %v674
        %688 = vmatprep.subr.bf16.mxu0 0
        %689 = vmatpush1.bf16.msra.mxu0 %v675
        %690 = vmatprep.subr.bf16.mxu0 0
        %691 = vmatpush1.bf16.msra.mxu0 %v676
        %692 = vmatprep.subr.bf16.mxu0 0
        %693 = vmatpush1.bf16.msra.mxu0 0
        %694 = vmatprep.subr.bf16.mxu0 0
        %695 = vmatpush1.bf16.msra.mxu0 0
        %696 = vmatprep.subr.bf16.mxu0 0
        %697 = vmatpush1.bf16.msra.mxu0 0
        %698 = vmatprep.subr.bf16.mxu0 0
        %699 = vmatpush1.bf16.msra.mxu0 0
        %700 = vmatprep.subr.bf16.mxu0 0
        %701 = vmatpush1.bf16.msra.mxu0 0
        %702 = vmatprep.subr.bf16.mxu0 0
        %703 = vmatpush1.bf16.msra.mxu0 0
        %704 = vmatprep.subr.bf16.mxu0 0
        %705 = vmatpush1.bf16.msra.mxu0 0
        %706 = vmatprep.subr.bf16.mxu0 0
        %707 = vmatpush1.bf16.msra.mxu0 0
        %708 = vmatprep.subr.bf16.mxu0 0
        %709 = vmatpush1.bf16.msra.mxu0 0
        %710 = vmatprep.subr.bf16.mxu0 0
        %711 = vmatpush1.bf16.msra.mxu0 0
        %712 = vmatprep.subr.bf16.mxu0 0
        %713 = vmatpush1.bf16.msra.mxu0 0
        %714 = vmatprep.subr.bf16.mxu0 0
        %715 = vmatpush1.bf16.msra.mxu0 0
        %716 = vmatprep.mubr.bf16.mxu0 0
        %717 = vmatmul.mubr.bf16.gmra.mrb[0].mxu0 %v682
        %v718 = vpop.f32.mrb[0].mxu0
        %v719 = vadd.f32 %v651, %v718
        %v720 = vpop.f32.mrb[0].mxu0
        %v721 = vpop.f32.mrb[0].mxu0
        %v722 = vadd.f32 %v654, %v721
        %v723 = vpop.f32.mrb[0].mxu0
        %724 = vdwg.mxu0
        %v725 = vpack.c.bf16 %v570, %v569
        %v726 = vld [vmem:[%s4 + $0x40] sm:$0xf]
        %v727 = vld [vmem:[%s4 + $0x44] sm:$0xf]
        %v728 = vld [vmem:[%s4 + $0x48] sm:$0xf]
        %v729 = vld [vmem:[%s4 + $0x4c] sm:$0xf]
        %v730 = vld [vmem:[%s4 + $0x50] sm:$0xf]
        %v731 = vld [vmem:[%s4 + $0x54] sm:$0xf]
        %v732 = vld [vmem:[%s4 + $0x58] sm:$0xf]
        %v733 = vld [vmem:[%s4 + $0x5c] sm:$0xf]
        %v742 = vunpack.c.l.b16 %v726
        %v743 = vunpack.c.l.b16 %v727
        %v744 = vunpack.c.l.b16 %v728
        %v745 = vunpack.c.l.b16 %v729
        %v746 = vunpack.c.l.b16 %v730
        %v747 = vunpack.c.l.b16 %v731
        %v748 = vunpack.c.l.b16 %v732
        %v749 = vunpack.c.l.b16 %v733
        %v750 = vpack.c.b16 %v743, %v742
        %v751 = vpack.c.b16 %v745, %v744
        %v752 = vpack.c.b16 %v747, %v746
        %v753 = vpack.c.b16 %v749, %v748
        %v759 = vsel %vm343, %v725, 0
        %761 = vmatprep.subr.bf16.mxu0 0
        %762 = vmatpush1.bf16.msra.mxu0 %v750
        %763 = vmatprep.subr.bf16.mxu0 0
        %764 = vmatpush1.bf16.msra.mxu0 %v751
        %765 = vmatprep.subr.bf16.mxu0 0
        %766 = vmatpush1.bf16.msra.mxu0 %v752
        %767 = vmatprep.subr.bf16.mxu0 0
        %768 = vmatpush1.bf16.msra.mxu0 %v753
        %769 = vmatprep.subr.bf16.mxu0 0
        %770 = vmatpush1.bf16.msra.mxu0 0
        %771 = vmatprep.subr.bf16.mxu0 0
        %772 = vmatpush1.bf16.msra.mxu0 0
        %773 = vmatprep.subr.bf16.mxu0 0
        %774 = vmatpush1.bf16.msra.mxu0 0
        %775 = vmatprep.subr.bf16.mxu0 0
        %776 = vmatpush1.bf16.msra.mxu0 0
        %777 = vmatprep.subr.bf16.mxu0 0
        %778 = vmatpush1.bf16.msra.mxu0 0
        %779 = vmatprep.subr.bf16.mxu0 0
        %780 = vmatpush1.bf16.msra.mxu0 0
        %781 = vmatprep.subr.bf16.mxu0 0
        %782 = vmatpush1.bf16.msra.mxu0 0
        %783 = vmatprep.subr.bf16.mxu0 0
        %784 = vmatpush1.bf16.msra.mxu0 0
        %785 = vmatprep.subr.bf16.mxu0 0
        %786 = vmatpush1.bf16.msra.mxu0 0
        %787 = vmatprep.subr.bf16.mxu0 0
        %788 = vmatpush1.bf16.msra.mxu0 0
        %789 = vmatprep.subr.bf16.mxu0 0
        %790 = vmatpush1.bf16.msra.mxu0 0
        %791 = vmatprep.subr.bf16.mxu0 0
        %792 = vmatpush1.bf16.msra.mxu0 0
        %793 = vmatprep.mubr.bf16.mxu0 0
        %794 = vmatmul.mubr.bf16.gmra.mrb[0].mxu0 %v759
        %v795 = vpop.f32.mrb[0].mxu0
        %v796 = vadd.f32 0.0, %v795
        %v797 = vpop.f32.mrb[0].mxu0
        %v798 = vpop.f32.mrb[0].mxu0
        %v799 = vadd.f32 0.0, %v798
        %v800 = vpop.f32.mrb[0].mxu0
        %801 = vdwg.mxu0
        %v802 = vadd.f32 %v719, %v796
        %v803 = vadd.f32 %v722, %v799
        %v804 = vld [vmem:[%s5] sm:$0x1]
        %v806 = vlaneseq
        %v807 = vshrl.u32 %v806, 7
        %v808 = vsub.s32 0, %v807
        %v809 = vrot.slane %v804, %v808
        %v811 = vmul.f32 %v802, %v809
        %v812 = vmul.f32 %v803, %v809
        %v813 = vld [vmem:[%s6] sm:$0x1]
        %v815 = vlaneseq
        %v816 = vshrl.u32 %v815, 7
        %v817 = vsub.s32 0, %v816
        %v818 = vrot.slane %v813, %v817
        %v820 = vadd.f32 %v811, %v818
        %v821 = vadd.f32 %v812, %v818
        %v822 = vadd.f32 %v278, %v820
        %v823 = vadd.f32 %v279, %v821
        %vm824 = vcmp.gt.f32.partialorder %v822, 0.0
        %vm825 = vcmp.gt.f32.partialorder %v823, 0.0
        %v826 = vmul.f32 %v822, 0.01
        %v827 = vmul.f32 %v823, 0.01
        %v828 = vsel %vm824, %v822, %v826
        %v829 = vsel %vm825, %v823, %v827
        %830 = vst.msk [vmem:[%s271] sm:$0xff] %vm343, %v828
        %831 = vst.msk [vmem:[%s271 + $0x8] sm:$0xff] %vm343, %v829
        %s832 = sand.u32 %s181, 1
        %s833 = scalar_lea.sflag [#allocation3], %s832
        %s834 = sand.u32 %s181, 1
        %s835 = smul.addr %s834, 16
        %s836 = scalar_lea.vmem [#allocation2], %s835
        // Predicated region
        $region49: #{tpu_custom_call.1} parent=47 // pred_check
          %p837 = pneg %p191
        $region50: #{tpu_custom_call.1} parent=47 // pred_check_branch
          %839 = sbr.rel (%p837) target = $region52
        $region51: #{tpu_custom_call.1} parent=47 // pred_region
          %s841 = ssub.s32 256, 256
          %842 = vsyncadd %s833, %s841
          %s843 = smul.addr %s21, 2
          %s844 = smul.addr %s843, 128
          %s845 = scalar_lea.hbm %s7, %s844
          %s846 = sshll.u32 %s836, 4
          %s847 = int_to_ptr.vmem [resolvable:$true] %s846
          %852 = dma.vmem_to_hbm [thread:$0]  %s847, 256, %s845, %s833, 128, 128, 8
        $region52: #{tpu_custom_call.1} parent=47 // pred_fallthru
          _
      $region48: #{tpu_custom_call.1} parent=5 // pred_fallthru
        _
      %p853 = scmp.le.s32.totalorder 2, %s16
      // Predicated region
      $region53: #{tpu_custom_call.1} parent=5 // pred_check
        %p854 = pneg %p853
      $region54: #{tpu_custom_call.1} parent=5 // pred_check_branch
        %856 = sbr.rel (%p854) target = $region56
      $region55: #{tpu_custom_call.1} parent=5 // pred_region
        %s857 = ssub.s32 %s16, 2
        // Predicated region
        $region57: #{tpu_custom_call.1} parent=55 // pred_check
          %p858 = pneg %p197
        $region58: #{tpu_custom_call.1} parent=55 // pred_check_branch
          %860 = sbr.rel (%p858) target = $region60
        $region59: #{tpu_custom_call.1} parent=55 // pred_region
          %s861 = sand.u32 %s182, 1
          %s862 = scalar_lea.sflag [#allocation3], %s861
          %s863 = sand.u32 %s182, 1
          %s864 = smul.addr %s863, 16
          %s865 = scalar_lea.vmem [#allocation2], %s864
          %866 = dma.done %s862, 256
        $region60: #{tpu_custom_call.1} parent=55 // pred_fallthru
          _
      $region56: #{tpu_custom_call.1} parent=5 // pred_fallthru
        _
    $region6: #{tpu_custom_call.1} parent=1 // loop_footer
      %s20 = sadd.s32 1, %s16
    $region7: #{tpu_custom_call.1} parent=1 // loop_footer_branch
      %15 = sbr.rel target = $region3
    $region8: #{tpu_custom_call.1} parent=1 // loop_exit
      _
    %867 = vsyncpa [#allocation3], 1
    %s868 = scalar_lea.sflag [#allocation3], 1
    %869 = vsyncpa %s868, 1

</llo_original>
